<compile_context>
chip_gen: v6e
topology: v6e:2x2x1
jax: 0.10.0
libtpu: 0.0.40
codegen_flags: <defaults>
</compile_context>

<pallas_src>
import jax
import jax.numpy as jnp
from jax.experimental import pallas as pl
from jax.experimental.pallas import tpu as pltpu

LANE = 128
SUB = 8


def _round_up(x, m):
    return (x + m - 1) // m * m


def ensemble_gnn_kernel(a_ref, x_ref, weff_ref, beff_ref, out_ref, ax_acc):
    """One (node-tile, K-tile) step of the folded ensemble forward.

    a_ref    : VMEM (TN, TK)  adjacency tile (bf16)
    x_ref    : VMEM (TK, Fp)  feature K-slab (bf16)
    weff_ref : VMEM (Fp, Cp)  raw-weight-combined projection (bf16, grid-invariant)
    beff_ref : VMEM (1, Cp)   raw-weight-combined bias (f32, grid-invariant)
    out_ref  : VMEM (TN, Cp)  weighted ensemble logits (f32, lane-dense)
    ax_acc   : VMEM (TN, Fp)  f32 accumulator for A@X over the K axis
    """
    k = pl.program_id(1)

    @pl.when(k == 0)
    def _():
        ax_acc[...] = jnp.zeros_like(ax_acc)

    # Shared message passing, accumulated in f32 over the K-tiled contraction.
    ax_acc[...] += jnp.dot(a_ref[...], x_ref[...], preferred_element_type=jnp.float32)

    @pl.when(k == pl.num_programs(1) - 1)
    def _():
        # Single effective-head projection + bias; lane-dense unmasked store.
        out_ref[...] = (
            jnp.dot(ax_acc[...].astype(jnp.bfloat16), weff_ref[...],
                    preferred_element_type=jnp.float32)
            + beff_ref[...]
        )


def _plan(N, F_, C):
    Fp = _round_up(F_, LANE)           # lane-pad feature dim for the MXU
    Cp = _round_up(C, LANE)            # lane-dense output (unmasked stores)
    # Square tile base: VMEM stays O(T*T) regardless of graph size.
    T = min(512, _round_up(N, LANE))
    Np = _round_up(N, T)
    TK = T
    # Guarantee >= 2 node-row grid steps so the "parallel" axis shards across
    # both TensorCores on v7x (Np is a multiple of 128 -> TN stays 8-aligned).
    TN = T if Np // T >= 2 else Np // 2
    return dict(Fp=Fp, Cp=Cp, Np=Np, TN=TN, TK=TK)


def prepare_graph(adj, x, plan):
    """O(N^2) pad + bf16 cast of the graph.

    Do this once per graph and cache the result; it is deliberately split out
    of the per-call path so repeated forward passes do not re-pay a full HBM
    pass over A.  (On v7x, a_p could additionally be stored as fp8 e4m3 since
    A is row-normalized in [0,1] -- left as bf16 here for portability.)
    """
    N, F_ = x.shape
    Np, Fp = plan["Np"], plan["Fp"]
    a_p = jnp.zeros((Np, Np), jnp.bfloat16).at[:N, :N].set(adj.astype(jnp.bfloat16))
    x_p = jnp.zeros((Np, Fp), jnp.bfloat16).at[:N, :F_].set(x.astype(jnp.bfloat16))
    return a_p, x_p


def ensemble_gnn_prepared(raw_weights, a_p, x_p, W, b, N, plan):
    M, F_, C = W.shape
    Fp, Cp, Np, TN, TK = (plan[k] for k in ("Fp", "Cp", "Np", "TN", "TK"))

    # Linearity fold: the forward sums member logits with the RAW weights
    # (the softmax it computes is unused), and each member is linear in A@X,
    # so the whole ensemble collapses to one effective head.
    w = raw_weights.astype(jnp.float32)
    w_eff = jnp.einsum("m,mfc->fc", w, W.astype(jnp.float32))
    b_eff = jnp.einsum("m,mc->c", w, b.astype(jnp.float32))
    w_eff_p = jnp.zeros((Fp, Cp), jnp.bfloat16).at[:F_, :C].set(w_eff.astype(jnp.bfloat16))
    b_eff_p = jnp.zeros((1, Cp), jnp.float32).at[0, :C].set(b_eff)

    grid = (Np // TN, Np // TK)

    flops = 2 * Np * Np * Fp + 2 * Np * Fp * Cp
    bytes_accessed = 2 * (Np * Np + Np * Fp + Fp * Cp) + 4 * (Cp + Np * Cp)

    # VMEM budget for this tile plan (double-buffered inputs/outputs + scratch),
    # used to set an explicit scoped-VMEM limit (kept < v7x's 64 MiB physical).
    vmem_bytes = (
        2 * TN * TK * 2      # A tile, bf16, double-buffered
        + 2 * TK * Fp * 2    # X slab, bf16, double-buffered
        + 2 * Fp * Cp * 2    # W_eff (grid-invariant)
        + 2 * Cp * 4         # b_eff
        + 2 * TN * Cp * 4    # output tile, f32, double-buffered
        + TN * Fp * 4        # AX accumulator scratch
    )
    vmem_limit = int(min(max(2 * vmem_bytes, 32 * 2**20), 48 * 2**20))

    out = pl.pallas_call(
        ensemble_gnn_kernel,
        out_shape=jax.ShapeDtypeStruct((Np, Cp), jnp.float32),
        grid_spec=pltpu.PrefetchScalarGridSpec(
            num_scalar_prefetch=0,
            grid=grid,
            in_specs=[
                pl.BlockSpec((TN, TK), lambda i, k: (i, k)),   # adjacency tile
                pl.BlockSpec((TK, Fp), lambda i, k: (k, 0)),   # feature K-slab
                pl.BlockSpec((Fp, Cp), lambda i, k: (0, 0)),   # effective weights
                pl.BlockSpec((1, Cp), lambda i, k: (0, 0)),    # effective bias
            ],
            out_specs=pl.BlockSpec((TN, Cp), lambda i, k: (i, 0)),
            scratch_shapes=[pltpu.VMEM((TN, Fp), jnp.float32)],
        ),
        compiler_params=pltpu.CompilerParams(
            dimension_semantics=("parallel", "arbitrary"),
            vmem_limit_bytes=vmem_limit,
        ),
        cost_estimate=pl.CostEstimate(
            flops=flops, transcendentals=0, bytes_accessed=bytes_accessed
        ),
    )(a_p, x_p, w_eff_p, b_eff_p)

    # Padded rows also receive +b_eff; they are sliced off here.
    return out[:N, :C]


def ensemble_gnn(raw_weights, adj, x, W, b):
    N, F_ = x.shape
    C = W.shape[-1]
    plan = _plan(N, F_, C)
    a_p, x_p = prepare_graph(adj, x, plan)   # cache/reuse across calls in real use
    return ensemble_gnn_prepared(raw_weights, a_p, x_p, W, b, N, plan)


def reference(raw_weights, adj, x, W, b):
    ax = adj @ x
    logits = jnp.einsum("nf,mfc->mnc", ax, W) + b[:, None, :]
    return jnp.einsum("m,mnc->nc", raw_weights, logits)


if __name__ == "__main__":
    key = jax.random.PRNGKey(0)
    kx, ka, kw, kb = jax.random.split(key, 4)

    M = 3    # ensemble members
    N = 16   # graph nodes
    F_ = 32  # input feature dim
    C = 8    # output classes (logits)

    # Deterministic synthetic parameters / inputs.
    x = jax.random.normal(kx, (N, F_), dtype=jnp.float32)
    adj_raw = (jax.random.uniform(ka, (N, N)) > 0.7).astype(jnp.float32)
    adj = adj_raw + jnp.eye(N, dtype=jnp.float32)            # self loops
    deg = jnp.maximum(adj.sum(axis=1, keepdims=True), 1.0)
    adj = adj / deg                                          # row-normalized A

    W = 0.1 * jax.random.normal(kw, (M, F_, C), dtype=jnp.float32)
    b = 0.1 * jax.random.normal(kb, (M, C), dtype=jnp.float32)

    # Ensemble weights summing to 1 (as asserted in __init__).
    raw_weights = jnp.array([0.5, 0.3, 0.2], dtype=jnp.float32)

    out = jax.block_until_ready(ensemble_gnn(raw_weights, adj, x, W, b))
    ref = reference(raw_weights, adj, x, W, b)

    assert out.shape == (N, C)
    # bf16 MXU inputs (f32 accumulation) vs the f32 reference -> loose tolerance.
    max_err = float(jnp.max(jnp.abs(out - ref)))
    assert jnp.allclose(out, ref, atol=2e-2, rtol=2e-2), (
        f"mismatch vs reference (max abs err {max_err})")

    print("KERNEL_OK")
</pallas_src>

<mosaic_0001>
module attributes {stable_mosaic.version = 11 : i64} {
  func.func @ensemble_gnn_kernel(%arg0: i32, %arg1: i32, %arg2: memref<64x128xbf16, #tpu.memory_space<vmem>>, %arg3: memref<128x128xbf16, #tpu.memory_space<vmem>>, %arg4: memref<128x128xbf16, #tpu.memory_space<vmem>>, %arg5: memref<1x128xf32, #tpu.memory_space<vmem>>, %arg6: memref<64x128xf32, #tpu.memory_space<vmem>>, %arg7: memref<64x128xf32, #tpu.memory_space<vmem>>) attributes {dimension_semantics = [#tpu.dimension_semantics<parallel>, #tpu.dimension_semantics<arbitrary>], iteration_bounds = array<i64: 2, 1>, scalar_prefetch = 0 : i64, scratch_operands = 1 : i64, tpu.core_type = #tpu.core_type<tc>, window_params = [{transform_indices = @transform_0, window_bounds = array<i64: 64, 128>}, {transform_indices = @transform_1, window_bounds = array<i64: 128, 128>}, {pipeline_mode = #tpu.pipeline_mode<synchronous>, transform_indices = @transform_2, window_bounds = array<i64: 128, 128>}, {pipeline_mode = #tpu.pipeline_mode<synchronous>, transform_indices = @transform_3, window_bounds = array<i64: 1, 128>}, {transform_indices = @transform_4, window_bounds = array<i64: 64, 128>}]} {
    %c0_i32 = arith.constant 0 : i32
    %0 = arith.cmpi eq, %arg1, %c0_i32 : i32
    %1 = arith.extui %0 : i1 to i32
    %c0_i32_0 = arith.constant 0 : i32
    %2 = arith.cmpi ne, %1, %c0_i32_0 : i32
    scf.if %2 {
      %cst_10 = arith.constant 0.000000e+00 : f32
      %12 = vector.broadcast %cst_10 : f32 to vector<64x128xf32>
      %c0_11 = arith.constant 0 : index
      %c0_12 = arith.constant 0 : index
      %13 = vector.load %arg7[%c0_11, %c0_12] : memref<64x128xf32, #tpu.memory_space<vmem>>, vector<64x128xf32>
      tpu.vector_store %arg7[%c0_11, %c0_12], %12 {strides = array<i32>} : memref<64x128xf32, #tpu.memory_space<vmem>>, vector<64x128xf32>,
    } else {
    }
    %c0 = arith.constant 0 : index
    %c0_1 = arith.constant 0 : index
    %3 = vector.load %arg7[%c0, %c0_1] : memref<64x128xf32, #tpu.memory_space<vmem>>, vector<64x128xf32>
    %c0_2 = arith.constant 0 : index
    %c0_3 = arith.constant 0 : index
    %4 = vector.load %arg2[%c0_2, %c0_3] : memref<64x128xbf16, #tpu.memory_space<vmem>>, vector<64x128xbf16>
    %c0_4 = arith.constant 0 : index
    %c0_5 = arith.constant 0 : index
    %5 = vector.load %arg3[%c0_4, %c0_5] : memref<128x128xbf16, #tpu.memory_space<vmem>>, vector<128x128xbf16>
    %cst = arith.constant dense<0.000000e+00> : vector<64x128xf32>
    %6 = tpu.matmul %4, %5, %cst {dimension_numbers = #tpu.dot_dimension_numbers<[1], [0], [0], [1], [0, 0, 1, 1], [], []>} : vector<64x128xbf16>, vector<128x128xbf16>, vector<64x128xf32> -> vector<64x128xf32>
    %7 = arith.addf %3, %6 : vector<64x128xf32>
    %c0_6 = arith.constant 0 : index
    %c0_7 = arith.constant 0 : index
    %8 = vector.load %arg7[%c0_6, %c0_7] : memref<64x128xf32, #tpu.memory_space<vmem>>, vector<64x128xf32>
    tpu.vector_store %arg7[%c0_6, %c0_7], %7 {strides = array<i32>} : memref<64x128xf32, #tpu.memory_space<vmem>>, vector<64x128xf32>,
    %c0_i32_8 = arith.constant 0 : i32
    %9 = arith.cmpi eq, %arg1, %c0_i32_8 : i32
    %10 = arith.extui %9 : i1 to i32
    %c0_i32_9 = arith.constant 0 : i32
    %11 = arith.cmpi ne, %10, %c0_i32_9 : i32
    scf.if %11 {
      %c0_10 = arith.constant 0 : index
      %c0_11 = arith.constant 0 : index
      %12 = vector.load %arg7[%c0_10, %c0_11] : memref<64x128xf32, #tpu.memory_space<vmem>>, vector<64x128xf32>
      %13 = arith.truncf %12 : vector<64x128xf32> to vector<64x128xbf16>
      %c0_12 = arith.constant 0 : index
      %c0_13 = arith.constant 0 : index
      %14 = vector.load %arg4[%c0_12, %c0_13] : memref<128x128xbf16, #tpu.memory_space<vmem>>, vector<128x128xbf16>
      %cst_14 = arith.constant dense<0.000000e+00> : vector<64x128xf32>
      %15 = tpu.matmul %13, %14, %cst_14 {dimension_numbers = #tpu.dot_dimension_numbers<[1], [0], [0], [1], [0, 0, 1, 1], [], []>} : vector<64x128xbf16>, vector<128x128xbf16>, vector<64x128xf32> -> vector<64x128xf32>
      %c0_15 = arith.constant 0 : index
      %c0_16 = arith.constant 0 : index
      %16 = vector.load %arg5[%c0_15, %c0_16] : memref<1x128xf32, #tpu.memory_space<vmem>>, vector<1x128xf32>
      %17 = vector.broadcast %16 : vector<1x128xf32> to vector<64x128xf32>
      %18 = arith.addf %15, %17 : vector<64x128xf32>
      %c0_17 = arith.constant 0 : index
      %c0_18 = arith.constant 0 : index
      %19 = vector.load %arg6[%c0_17, %c0_18] : memref<64x128xf32, #tpu.memory_space<vmem>>, vector<64x128xf32>
      tpu.vector_store %arg6[%c0_17, %c0_18], %18 {strides = array<i32>} : memref<64x128xf32, #tpu.memory_space<vmem>>, vector<64x128xf32>,
    } else {
    }
    return
  }
  func.func @transform_0(%arg0: i32, %arg1: i32) -> (i32, i32) {
    %c0_i32 = arith.constant 0 : i32
    return %arg0, %arg1 : i32, i32
  }
  func.func @transform_1(%arg0: i32, %arg1: i32) -> (i32, i32) {
    %c0_i32 = arith.constant 0 : i32
    %c0_i32_0 = arith.constant 0 : i32
    return %arg1, %c0_i32 : i32, i32
  }
  func.func @transform_2(%arg0: i32, %arg1: i32) -> (i32, i32) {
    %c0_i32 = arith.constant 0 : i32
    %c0_i32_0 = arith.constant 0 : i32
    %c0_i32_1 = arith.constant 0 : i32
    return %c0_i32, %c0_i32_0 : i32, i32
  }
  func.func @transform_3(%arg0: i32, %arg1: i32) -> (i32, i32) {
    %c0_i32 = arith.constant 0 : i32
    %c0_i32_0 = arith.constant 0 : i32
    %c0_i32_1 = arith.constant 0 : i32
    return %c0_i32, %c0_i32_0 : i32, i32
  }
  func.func @transform_4(%arg0: i32, %arg1: i32) -> (i32, i32) {
    %c0_i32 = arith.constant 0 : i32
    %c0_i32_0 = arith.constant 0 : i32
    return %arg0, %c0_i32 : i32, i32
  }
}

</mosaic_0001>

<llo_original>
// kernel: tpu_custom_call.1
$region0: #{tpu_custom_call.1}
  #allocation0 [shape = 'u32[]', space=smem, size = 0x4, offset = 0x4, fixed_abs, tag = 'smem constant byte address 0x4 - core index']
  #allocation1 [shape = 'u32[144,128]{1,0:T(1,128)}', space=vmem, size = 0x12000, scoped, tag = 'internal scratch']
  #allocation2 [shape = 'f32[64,128]{1,0:T(8,128)}', space=vmem, size = 0x8000, scoped, tag = 'scratch operand']
  %s0 = inlined_call_operand.hbm [shape: bf16[128,128], index: 0, kind: input, shape index: {}]
  %s1 = inlined_call_operand.hbm [shape: bf16[128,128], index: 1, kind: input, shape index: {}]
  %s2 = inlined_call_operand.hbm [shape: bf16[128,128], index: 2, kind: input, shape index: {}]
  %s3 = inlined_call_operand.vmem [shape: f32[1,128], index: 3, kind: input, shape index: {}]
  %s4 = inlined_call_operand.hbm [shape: f32[128,128], index: 4, kind: output, shape index: {}]
  %s5 = sld [smem:[#allocation0]]
  $region69: #{tpu_custom_call.1} parent=0
    _
  %s7 = ssub.s32 1, %s5
  %s8 = scalar_select 0, %s7, %s5
  $region1: #{tpu_custom_call.1} parent=0
    #allocation3 [shape = 'u8[32768]{0}', space=vmem, size = 0x8000, scoped, tag = 'input window, operand 0']
    #allocation4 [shape = 's32[2]{0}', space=sflag, size = 0x8, scoped, tag = 'scoped memory for tpu_custom_call.1']
    #allocation5 [shape = 's32[2]{0}', space=sflag, size = 0x8, scoped, tag = 'scoped memory for tpu_custom_call.1']
    #allocation6 [shape = 'u8[32768]{0}', space=vmem, size = 0x8000, scoped, tag = 'input window, operand 1, single buffered']
    #allocation7 [shape = 's32[1]{0}', space=sflag, size = 0x4, scoped, tag = 'scoped memory for tpu_custom_call.1']
    #allocation8 [shape = 'u8[32768]{0}', space=vmem, size = 0x8000, scoped, tag = 'input window, operand 2, single buffered']
    #allocation9 [shape = 'u8[65536]{0}', space=vmem, size = 0x10000, scoped, tag = 'output window, operand 0']
    %9 = vsyncpa [#allocation4], 0
    %s10 = scalar_lea.sflag [#allocation4], 1
    %11 = vsyncpa %s10, 0
    %12 = vsyncpa [#allocation7], 0
    %13 = vsyncpa [#allocation5], 0
    %s14 = scalar_lea.sflag [#allocation5], 1
    %15 = vsyncpa %s14, 0
    loop: start=0, step=1, limit=4
    $region2: #{tpu_custom_call.1} parent=1 // loop_pre_header
      _
    $region3: #{tpu_custom_call.1} parent=1 // loop_header
      %s17 = sphi 0, %s21
      %p18 = scmp.ge.s32.totalorder %s17, 4
      %s24 = sphi 0, %s36
      %s25 = sphi 0, %s32
      %s26 = sphi 0, %s24
      %s27 = sphi 0, %s25
      %s28 = sphi 0, %s26
      %s29 = sphi 0, %s27
      %s41 = sphi 0, %s43
      %s44 = sphi 0, %s41
      %s45 = sphi 0, %s44
      %s61 = sphi 0, %s45
      %s67 = sphi 0, %s69
      %s70 = sphi 0, %s67
      %s71 = sphi 0, %s70
      %s87 = sphi 0, %s71
      %s91 = sphi 0, %s91
      %s93 = sphi 0, %s91
      %s94 = sphi 0, %s93
      %s108 = sphi 0, %s94
      %s112 = sphi 0, %s112
      %s114 = sphi 0, %s112
      %s115 = sphi 0, %s114
      %s129 = sphi 0, %s115
      %s135 = sphi 0, %s137
      %s138 = sphi 0, %s135
      %s139 = sphi 0, %s138
      %s155 = sphi 0, %s139
    $region4: #{tpu_custom_call.1} parent=1 // loop_header_branch
      %20 = sbr.rel (%p18) target = $region8
    $region5: #{tpu_custom_call.1} parent=1 // loop_body
      %s22 = ssub.s32 %s17, 1
      %s23 = ssub.s32 %s17, 2
      %s30 = sadd.s32 1, %s25
      %p31 = scmp.ge.s32.totalorder %s30, 1
      %s32 = scalar_select %p31, 0, %s30
      %s33 = sadd.s32 1, %s24
      %s34 = scalar_select %p31, %s33, %s24
      %p35 = scmp.ge.s32.totalorder %s34, 2
      %s36 = scalar_select %p35, 0, %s34
      %s37 = ssub.s32 %s24, %s36
      %s38 = ssub.s32 %s25, %s32
      %s39 = sor.u32 %s37, %s38
      %p40 = scmp.eq.s32.totalorder %s39, 0
      %s42 = sadd.s32 %s41, 1
      %s43 = scalar_select %p40, %s41, %s42
      %p46 = pneg %p40
      %p47 = scmp.eq.s32.totalorder %s17, 1
      %p48 = por %p46, %p47
      %p49 = scmp.ne.s32.totalorder %s41, %s44
      %p50 = scmp.eq.s32.totalorder %s17, 0
      %p51 = por %p49, %p50
      %p52 = scmp.ne.s32.totalorder %s41, %s44
      %p53 = scmp.eq.s32.totalorder %s22, 1
      %p54 = por %p52, %p53
      %p55 = scmp.ne.s32.totalorder %s44, %s45
      %p56 = scmp.eq.s32.totalorder %s22, 0
      %p57 = por %p55, %p56
      %p58 = scmp.ne.s32.totalorder %s44, %s45
      %p59 = scmp.eq.s32.totalorder %s23, 1
      %p60 = por %p58, %p59
      %p62 = scmp.ne.s32.totalorder %s45, %s61
      %p63 = scmp.eq.s32.totalorder %s23, 0
      %p64 = por %p62, %p63
      %s65 = ssub.s32 %s25, %s32
      %p66 = scmp.eq.s32.totalorder %s65, 0
      %s68 = sadd.s32 %s67, 1
      %s69 = scalar_select %p66, %s67, %s68
      %p72 = pneg %p66
      %p73 = scmp.eq.s32.totalorder %s17, 1
      %p74 = por %p72, %p73
      %p75 = scmp.ne.s32.totalorder %s67, %s70
      %p76 = scmp.eq.s32.totalorder %s17, 0
      %p77 = por %p75, %p76
      %p78 = scmp.ne.s32.totalorder %s67, %s70
      %p79 = scmp.eq.s32.totalorder %s22, 1
      %p80 = por %p78, %p79
      %p81 = scmp.ne.s32.totalorder %s70, %s71
      %p82 = scmp.eq.s32.totalorder %s22, 0
      %p83 = por %p81, %p82
      %p84 = scmp.ne.s32.totalorder %s70, %s71
      %p85 = scmp.eq.s32.totalorder %s23, 1
      %p86 = por %p84, %p85
      %p88 = scmp.ne.s32.totalorder %s71, %s87
      %p89 = scmp.eq.s32.totalorder %s23, 0
      %p90 = por %p88, %p89
      %s92 = sadd.s32 %s91, 1
      %p95 = scmp.eq.s32.totalorder %s17, 1
      %p96 = scmp.ne.s32.totalorder %s91, %s93
      %p97 = scmp.eq.s32.totalorder %s17, 0
      %p98 = por %p96, %p97
      %p99 = scmp.ne.s32.totalorder %s91, %s93
      %p100 = scmp.eq.s32.totalorder %s22, 1
      %p101 = por %p99, %p100
      %p102 = scmp.ne.s32.totalorder %s93, %s94
      %p103 = scmp.eq.s32.totalorder %s22, 0
      %p104 = por %p102, %p103
      %p105 = scmp.ne.s32.totalorder %s93, %s94
      %p106 = scmp.eq.s32.totalorder %s23, 1
      %p107 = por %p105, %p106
      %p109 = scmp.ne.s32.totalorder %s94, %s108
      %p110 = scmp.eq.s32.totalorder %s23, 0
      %p111 = por %p109, %p110
      %s113 = sadd.s32 %s112, 1
      %p116 = scmp.eq.s32.totalorder %s17, 1
      %p117 = scmp.ne.s32.totalorder %s112, %s114
      %p118 = scmp.eq.s32.totalorder %s17, 0
      %p119 = por %p117, %p118
      %p120 = scmp.ne.s32.totalorder %s112, %s114
      %p121 = scmp.eq.s32.totalorder %s22, 1
      %p122 = por %p120, %p121
      %p123 = scmp.ne.s32.totalorder %s114, %s115
      %p124 = scmp.eq.s32.totalorder %s22, 0
      %p125 = por %p123, %p124
      %p126 = scmp.ne.s32.totalorder %s114, %s115
      %p127 = scmp.eq.s32.totalorder %s23, 1
      %p128 = por %p126, %p127
      %p130 = scmp.ne.s32.totalorder %s115, %s129
      %p131 = scmp.eq.s32.totalorder %s23, 0
      %p132 = por %p130, %p131
      %s133 = ssub.s32 %s24, %s36
      %p134 = scmp.eq.s32.totalorder %s133, 0
      %s136 = sadd.s32 %s135, 1
      %s137 = scalar_select %p134, %s135, %s136
      %p140 = pneg %p134
      %p141 = scmp.eq.s32.totalorder %s17, 1
      %p142 = por %p140, %p141
      %p143 = scmp.ne.s32.totalorder %s135, %s138
      %p144 = scmp.eq.s32.totalorder %s17, 0
      %p145 = por %p143, %p144
      %p146 = scmp.ne.s32.totalorder %s135, %s138
      %p147 = scmp.eq.s32.totalorder %s22, 1
      %p148 = por %p146, %p147
      %p149 = scmp.ne.s32.totalorder %s138, %s139
      %p150 = scmp.eq.s32.totalorder %s22, 0
      %p151 = por %p149, %p150
      %p152 = scmp.ne.s32.totalorder %s138, %s139
      %p153 = scmp.eq.s32.totalorder %s23, 1
      %p154 = por %p152, %p153
      %p156 = scmp.ne.s32.totalorder %s139, %s155
      %p157 = scmp.eq.s32.totalorder %s23, 0
      %p158 = por %p156, %p157
      %p159 = scmp.le.s32.totalorder 1, %s17
      %p160 = scmp.lt.s32.totalorder %s17, 3
      %p161 = pnand %p159, %p160
      %p162 = pneg %p161
      // Predicated region
      $region9: #{tpu_custom_call.1} parent=5 // pred_check
        _
      $region10: #{tpu_custom_call.1} parent=5 // pred_check_branch
        %164 = sbr.rel (%p161) target = $region12
      $region11: #{tpu_custom_call.1} parent=5 // pred_region
        %s165 = ssub.s32 %s17, 1
        // Predicated region
        $region13: #{tpu_custom_call.1} parent=11 // pred_check
          %p166 = pneg %p83
        $region14: #{tpu_custom_call.1} parent=11 // pred_check_branch
          %168 = sbr.rel (%p166) target = $region16
        $region15: #{tpu_custom_call.1} parent=11 // pred_region
          %s169 = smul.u32 16, %s27
          %s171 = ssub.s32 1024, 1024
          %172 = vsyncadd [#allocation7], %s171
          %s173 = smul.addr %s169, 64
          %s174 = scalar_lea.hbm %s1, %s173
          %s175 = sshll.u32 [#allocation6], 4
          %s176 = int_to_ptr.vmem [resolvable:$true] %s175
          %181 = dma.hbm_to_vmem [thread:$0]  %s174, 1024, %s176, [#allocation7], 64, 64, 4
        $region16: #{tpu_custom_call.1} parent=11 // pred_fallthru
          _
        // Predicated region
        $region17: #{tpu_custom_call.1} parent=11 // pred_check
          %p182 = pneg %p104
        $region18: #{tpu_custom_call.1} parent=11 // pred_check_branch
          %184 = sbr.rel (%p182) target = $region20
        $region19: #{tpu_custom_call.1} parent=11 // pred_region
          %s186 = ssub.s32 1024, 1024
          %187 = vsyncadd [#allocation7], %s186
          %s188 = sshll.u32 [#allocation8], 4
          %s189 = int_to_ptr.vmem [resolvable:$true] %s188
          %194 = dma.hbm_to_vmem [thread:$0]  %s2, 1024, %s189, [#allocation7], 64, 64, 4
        $region20: #{tpu_custom_call.1} parent=11 // pred_fallthru
          _
        // Predicated region
        $region21: #{tpu_custom_call.1} parent=11 // pred_check
          %p195 = pneg %p125
        $region22: #{tpu_custom_call.1} parent=11 // pred_check_branch
          %197 = sbr.rel (%p195) target = $region24
        $region23: #{tpu_custom_call.1} parent=11 // pred_region
          _
        $region24: #{tpu_custom_call.1} parent=11 // pred_fallthru
          _
      $region12: #{tpu_custom_call.1} parent=5 // pred_fallthru
        _
      %p198 = scmp.lt.s32.totalorder %s17, 2
      // Predicated region
      $region25: #{tpu_custom_call.1} parent=5 // pred_check
        %p199 = pneg %p198
      $region26: #{tpu_custom_call.1} parent=5 // pred_check_branch
        %201 = sbr.rel (%p199) target = $region28
      $region27: #{tpu_custom_call.1} parent=5 // pred_region
        // Predicated region
        $region29: #{tpu_custom_call.1} parent=27 // pred_check
          %p202 = pneg %p51
        $region30: #{tpu_custom_call.1} parent=27 // pred_check_branch
          %204 = sbr.rel (%p202) target = $region32
        $region31: #{tpu_custom_call.1} parent=27 // pred_region
          %s205 = sand.u32 %s41, 1
          %s206 = scalar_lea.sflag [#allocation4], %s205
          %s207 = sand.u32 %s41, 1
          %s208 = smul.addr %s207, 32
          %s209 = scalar_lea.vmem [#allocation3], %s208
          %s210 = smul.u32 8, %s24
          %s212 = ssub.s32 512, 512
          %213 = vsyncadd %s206, %s212
          %s214 = sadd.s32 %s25, %s210
          %s215 = smul.addr %s214, 64
          %s216 = scalar_lea.hbm %s0, %s215
          %s217 = sshll.u32 %s209, 4
          %s218 = int_to_ptr.vmem [resolvable:$true] %s217
          %223 = dma.hbm_to_vmem [thread:$0]  %s216, 512, %s218, %s206, 64, 64, 4
        $region32: #{tpu_custom_call.1} parent=27 // pred_fallthru
          _
      $region28: #{tpu_custom_call.1} parent=5 // pred_fallthru
        _
      %p224 = scmp.le.s32.totalorder 1, %s17
      %p225 = scmp.lt.s32.totalorder %s17, 3
      %p226 = pnand %p224, %p225
      %p227 = pneg %p226
      // Predicated region
      $region33: #{tpu_custom_call.1} parent=5 // pred_check
        _
      $region34: #{tpu_custom_call.1} parent=5 // pred_check_branch
        %229 = sbr.rel (%p226) target = $region36
      $region35: #{tpu_custom_call.1} parent=5 // pred_region
        %s230 = ssub.s32 %s17, 1
        %s231 = sand.u32 %s44, 1
        %s232 = scalar_lea.sflag [#allocation4], %s231
        %s233 = sand.u32 %s44, 1
        %s234 = smul.addr %s233, 32
        %s235 = scalar_lea.vmem [#allocation3], %s234
        // Predicated region
        $region37: #{tpu_custom_call.1} parent=35 // pred_check
          %p236 = pneg %p57
        $region38: #{tpu_custom_call.1} parent=35 // pred_check_branch
          %238 = sbr.rel (%p236) target = $region40
        $region39: #{tpu_custom_call.1} parent=35 // pred_region
          %239 = dma.done %s232, 512
        $region40: #{tpu_custom_call.1} parent=35 // pred_fallthru
          _
        // Predicated region
        $region41: #{tpu_custom_call.1} parent=35 // pred_check
          %p240 = pneg %p83
        $region42: #{tpu_custom_call.1} parent=35 // pred_check_branch
          %242 = sbr.rel (%p240) target = $region44
        $region43: #{tpu_custom_call.1} parent=35 // pred_region
          %243 = dma.done [#allocation7], 1024
        $region44: #{tpu_custom_call.1} parent=35 // pred_fallthru
          _
        // Predicated region
        $region45: #{tpu_custom_call.1} parent=35 // pred_check
          %p244 = pneg %p104
        $region46: #{tpu_custom_call.1} parent=35 // pred_check_branch
          %246 = sbr.rel (%p244) target = $region48
        $region47: #{tpu_custom_call.1} parent=35 // pred_region
          %247 = dma.done [#allocation7], 1024
        $region48: #{tpu_custom_call.1} parent=35 // pred_fallthru
          _
        %s248 = sand.u32 %s44, 1
        %s249 = scalar_lea.sflag [#allocation4], %s248
        %s250 = sand.u32 %s44, 1
        %s251 = smul.addr %s250, 32
        %s252 = scalar_lea.vmem [#allocation3], %s251
        %p253 = pneg %p57
        %p254 = pneg %p54
        %p255 = pneg %p83
        %p256 = pneg %p80
        %p257 = pneg %p104
        %p258 = pneg %p101
        %p259 = pneg %p125
        %p260 = pneg %p122
        %p261 = pneg %p151
        %p262 = pneg %p148
        %s263 = sand.u32 %s138, 1
        %s264 = scalar_lea.sflag [#allocation5], %s263
        %s265 = sand.u32 %s138, 1
        %s266 = smul.addr %s265, 64
        %s267 = scalar_lea.vmem [#allocation9], %s266
        %s268 = smul.u32 8, %s26
        %s269 = smul.u32 16, %s27
        %s270 = smul.u32 8, %s26
        %p272 = scmp.eq.s32.totalorder %s27, 0
        // Predicated region
        $region49: #{tpu_custom_call.1} parent=35 // pred_check
          %p273 = pneg %p272
        $region50: #{tpu_custom_call.1} parent=35 // pred_check_branch
          %275 = sbr.rel (%p273) target = $region52
        $region51: #{tpu_custom_call.1} parent=35 // pred_region
          %276 = vst [vmem:[#allocation2] sm:$0xff] 0.0
          %277 = vst [vmem:[#allocation2 + $0x8] sm:$0xff] 0.0
          %278 = vst [vmem:[#allocation2 + $0x10] sm:$0xff] 0.0
          %279 = vst [vmem:[#allocation2 + $0x18] sm:$0xff] 0.0
          %280 = vst [vmem:[#allocation2 + $0x20] sm:$0xff] 0.0
          %281 = vst [vmem:[#allocation2 + $0x28] sm:$0xff] 0.0
          %282 = vst [vmem:[#allocation2 + $0x30] sm:$0xff] 0.0
          %283 = vst [vmem:[#allocation2 + $0x38] sm:$0xff] 0.0
        $region52: #{tpu_custom_call.1} parent=35 // pred_fallthru
          _
        %v284 = vld [vmem:[#allocation2] sm:$0xff]
        %v285 = vld [vmem:[#allocation2 + $0x8] sm:$0xff]
        %v286 = vld [vmem:[#allocation2 + $0x10] sm:$0xff]
        %v287 = vld [vmem:[#allocation2 + $0x18] sm:$0xff]
        %v288 = vld [vmem:[#allocation2 + $0x20] sm:$0xff]
        %v289 = vld [vmem:[#allocation2 + $0x28] sm:$0xff]
        %v290 = vld [vmem:[#allocation2 + $0x30] sm:$0xff]
        %v291 = vld [vmem:[#allocation2 + $0x38] sm:$0xff]
        %v292 = vld [vmem:[%s235] sm:$0xf]
        %v293 = vld [vmem:[%s235 + $0x4] sm:$0xf]
        %v294 = vld [vmem:[%s235 + $0x8] sm:$0xf]
        %v295 = vld [vmem:[%s235 + $0xc] sm:$0xf]
        %v296 = vld [vmem:[%s235 + $0x10] sm:$0xf]
        %v297 = vld [vmem:[%s235 + $0x14] sm:$0xf]
        %v298 = vld [vmem:[%s235 + $0x18] sm:$0xf]
        %v299 = vld [vmem:[%s235 + $0x1c] sm:$0xf]
        %v300 = vld [vmem:[#allocation6] sm:$0xf]
        %v301 = vld [vmem:[#allocation6 + $0x4] sm:$0xf]
        %v302 = vld [vmem:[#allocation6 + $0x8] sm:$0xf]
        %v303 = vld [vmem:[#allocation6 + $0xc] sm:$0xf]
        %v304 = vld [vmem:[#allocation6 + $0x10] sm:$0xf]
        %v305 = vld [vmem:[#allocation6 + $0x14] sm:$0xf]
        %v306 = vld [vmem:[#allocation6 + $0x18] sm:$0xf]
        %v307 = vld [vmem:[#allocation6 + $0x1c] sm:$0xf]
        %v308 = vld [vmem:[#allocation6 + $0x20] sm:$0xf]
        %v309 = vld [vmem:[#allocation6 + $0x24] sm:$0xf]
        %v310 = vld [vmem:[#allocation6 + $0x28] sm:$0xf]
        %v311 = vld [vmem:[#allocation6 + $0x2c] sm:$0xf]
        %v312 = vld [vmem:[#allocation6 + $0x30] sm:$0xf]
        %v313 = vld [vmem:[#allocation6 + $0x34] sm:$0xf]
        %v314 = vld [vmem:[#allocation6 + $0x38] sm:$0xf]
        %v315 = vld [vmem:[#allocation6 + $0x3c] sm:$0xf]
        %v324 = vunpack.c.l.b16 %v292
        %v325 = vunpack.c.l.b16 %v293
        %v326 = vunpack.c.l.b16 %v294
        %v327 = vunpack.c.l.b16 %v295
        %v328 = vunpack.c.l.b16 %v296
        %v329 = vunpack.c.l.b16 %v297
        %v330 = vunpack.c.l.b16 %v298
        %v331 = vunpack.c.l.b16 %v299
        %v332 = vpack.c.b16 %v325, %v324
        %v333 = vpack.c.b16 %v327, %v326
        %v334 = vpack.c.b16 %v329, %v328
        %v335 = vpack.c.b16 %v331, %v330
        %v356 = vunpack.c.l.b16 %v300
        %v357 = vunpack.c.l.b16 %v301
        %v358 = vunpack.c.l.b16 %v302
        %v359 = vunpack.c.l.b16 %v303
        %v360 = vunpack.c.l.b16 %v304
        %v361 = vunpack.c.l.b16 %v305
        %v362 = vunpack.c.l.b16 %v306
        %v363 = vunpack.c.l.b16 %v307
        %v364 = vunpack.c.l.b16 %v308
        %v365 = vunpack.c.l.b16 %v309
        %v366 = vunpack.c.l.b16 %v310
        %v367 = vunpack.c.l.b16 %v311
        %v368 = vunpack.c.l.b16 %v312
        %v369 = vunpack.c.l.b16 %v313
        %v370 = vunpack.c.l.b16 %v314
        %v371 = vunpack.c.l.b16 %v315
        %v372 = vpack.c.b16 %v357, %v356
        %v373 = vpack.c.b16 %v359, %v358
        %v374 = vpack.c.b16 %v361, %v360
        %v375 = vpack.c.b16 %v363, %v362
        %v376 = vpack.c.b16 %v365, %v364
        %v377 = vpack.c.b16 %v367, %v366
        %v378 = vpack.c.b16 %v369, %v368
        %v379 = vpack.c.b16 %v371, %v370
        %388 = vmatprep.subr.bf16.mxu0 0
        %389 = vmatpush1.bf16.msra.mxu0 %v379
        %390 = vmatprep.subr.bf16.mxu0 0
        %391 = vmatpush1.bf16.msra.mxu0 %v378
        %392 = vmatprep.subr.bf16.mxu0 0
        %393 = vmatpush1.bf16.msra.mxu0 %v377
        %394 = vmatprep.subr.bf16.mxu0 0
        %395 = vmatpush1.bf16.msra.mxu0 %v376
        %396 = vmatprep.subr.bf16.mxu0 0
        %397 = vmatpush1.bf16.msra.mxu0 %v375
        %398 = vmatprep.subr.bf16.mxu0 0
        %399 = vmatpush1.bf16.msra.mxu0 %v374
        %400 = vmatprep.subr.bf16.mxu0 0
        %401 = vmatpush1.bf16.msra.mxu0 %v373
        %402 = vmatprep.subr.bf16.mxu0 0
        %403 = vmatpush1.bf16.msra.mxu0 %v372
        %404 = vmatprep.subr.bf16.mxu0 0
        %405 = vmatpush2.bf16.msra.mxu0 0
        %406 = vmatprep.subr.bf16.mxu0 0
        %407 = vmatpush2.bf16.msra.mxu0 0
        %408 = vmatprep.subr.bf16.mxu0 0
        %409 = vmatpush2.bf16.msra.mxu0 0
        %410 = vmatprep.subr.bf16.mxu0 0
        %411 = vmatpush2.bf16.msra.mxu0 0
        %412 = vmatprep.subr.bf16.mxu0 0
        %413 = vmatpush2.bf16.msra.mxu0 0
        %414 = vmatprep.subr.bf16.mxu0 0
        %415 = vmatpush2.bf16.msra.mxu0 0
        %416 = vmatprep.subr.bf16.mxu0 0
        %417 = vmatpush2.bf16.msra.mxu0 0
        %418 = vmatprep.subr.bf16.mxu0 0
        %419 = vmatpush2.bf16.msra.mxu0 0
        %420 = vmatprep.mubr.bf16.mxu0 0
        %421 = vmatmul.mubr.bf16.gmra.mxu0 %v332
        %v422 = vpop.f32.mrf.mxu0
        %v423 = vadd.f32 0.0, %v422
        %v424 = vpop.f32.mrf.mxu0
        %v425 = vpop.f32.mrf.mxu0
        %v426 = vadd.f32 0.0, %v425
        %v427 = vpop.f32.mrf.mxu0
        %428 = vmatprep.mubr.bf16.mxu0 0
        %429 = vmatmul.mubr.bf16.gmra.mxu0 %v333
        %v430 = vpop.f32.mrf.mxu0
        %v431 = vadd.f32 0.0, %v430
        %v432 = vpop.f32.mrf.mxu0
        %v433 = vpop.f32.mrf.mxu0
        %v434 = vadd.f32 0.0, %v433
        %v435 = vpop.f32.mrf.mxu0
        %436 = vmatprep.mubr.bf16.mxu0 0
        %437 = vmatmul.mubr.bf16.gmra.mxu0 %v334
        %v438 = vpop.f32.mrf.mxu0
        %v439 = vadd.f32 0.0, %v438
        %v440 = vpop.f32.mrf.mxu0
        %v441 = vpop.f32.mrf.mxu0
        %v442 = vadd.f32 0.0, %v441
        %v443 = vpop.f32.mrf.mxu0
        %444 = vmatprep.mubr.bf16.mxu0 0
        %445 = vmatmul.mubr.bf16.gmra.mxu0 %v335
        %v446 = vpop.f32.mrf.mxu0
        %v447 = vadd.f32 0.0, %v446
        %v448 = vpop.f32.mrf.mxu0
        %v449 = vpop.f32.mrf.mxu0
        %v450 = vadd.f32 0.0, %v449
        %v451 = vpop.f32.mrf.mxu0
        %452 = vdwg.mxu0
        %v453 = vadd.f32 %v284, %v423
        %v454 = vadd.f32 %v285, %v426
        %v455 = vadd.f32 %v286, %v431
        %v456 = vadd.f32 %v287, %v434
        %v457 = vadd.f32 %v288, %v439
        %v458 = vadd.f32 %v289, %v442
        %v459 = vadd.f32 %v290, %v447
        %v460 = vadd.f32 %v291, %v450
        %461 = vst [vmem:[#allocation2] sm:$0xff] %v453
        %462 = vst [vmem:[#allocation2 + $0x8] sm:$0xff] %v454
        %463 = vst [vmem:[#allocation2 + $0x10] sm:$0xff] %v455
        %464 = vst [vmem:[#allocation2 + $0x18] sm:$0xff] %v456
        %465 = vst [vmem:[#allocation2 + $0x20] sm:$0xff] %v457
        %466 = vst [vmem:[#allocation2 + $0x28] sm:$0xff] %v458
        %467 = vst [vmem:[#allocation2 + $0x30] sm:$0xff] %v459
        %468 = vst [vmem:[#allocation2 + $0x38] sm:$0xff] %v460
        // Predicated region
        $region53: #{tpu_custom_call.1} parent=35 // pred_check
          %p469 = pneg %p272
        $region54: #{tpu_custom_call.1} parent=35 // pred_check_branch
          %471 = sbr.rel (%p469) target = $region56
        $region55: #{tpu_custom_call.1} parent=35 // pred_region
          %v472 = vld [vmem:[#allocation2] sm:$0xff]
          %v473 = vld [vmem:[#allocation2 + $0x8] sm:$0xff]
          %v474 = vld [vmem:[#allocation2 + $0x10] sm:$0xff]
          %v475 = vld [vmem:[#allocation2 + $0x18] sm:$0xff]
          %v476 = vld [vmem:[#allocation2 + $0x20] sm:$0xff]
          %v477 = vld [vmem:[#allocation2 + $0x28] sm:$0xff]
          %v478 = vld [vmem:[#allocation2 + $0x30] sm:$0xff]
          %v479 = vld [vmem:[#allocation2 + $0x38] sm:$0xff]
          %v480 = vpack.c.bf16 %v473, %v472
          %v481 = vpack.c.bf16 %v475, %v474
          %v482 = vpack.c.bf16 %v477, %v476
          %v483 = vpack.c.bf16 %v479, %v478
          %v484 = vld [vmem:[#allocation8] sm:$0xf]
          %v485 = vld [vmem:[#allocation8 + $0x4] sm:$0xf]
          %v486 = vld [vmem:[#allocation8 + $0x8] sm:$0xf]
          %v487 = vld [vmem:[#allocation8 + $0xc] sm:$0xf]
          %v488 = vld [vmem:[#allocation8 + $0x10] sm:$0xf]
          %v489 = vld [vmem:[#allocation8 + $0x14] sm:$0xf]
          %v490 = vld [vmem:[#allocation8 + $0x18] sm:$0xf]
          %v491 = vld [vmem:[#allocation8 + $0x1c] sm:$0xf]
          %v492 = vld [vmem:[#allocation8 + $0x20] sm:$0xf]
          %v493 = vld [vmem:[#allocation8 + $0x24] sm:$0xf]
          %v494 = vld [vmem:[#allocation8 + $0x28] sm:$0xf]
          %v495 = vld [vmem:[#allocation8 + $0x2c] sm:$0xf]
          %v496 = vld [vmem:[#allocation8 + $0x30] sm:$0xf]
          %v497 = vld [vmem:[#allocation8 + $0x34] sm:$0xf]
          %v498 = vld [vmem:[#allocation8 + $0x38] sm:$0xf]
          %v499 = vld [vmem:[#allocation8 + $0x3c] sm:$0xf]
          %v500 = vld [vmem:[%s3] sm:$0x1]
          %v502 = vlaneseq
          %v503 = vshrl.u32 %v502, 7
          %v504 = vsub.s32 0, %v503
          %v505 = vrot.slane %v500, %v504
          %v523 = vunpack.c.l.b16 %v484
          %v524 = vunpack.c.l.b16 %v485
          %v525 = vunpack.c.l.b16 %v486
          %v526 = vunpack.c.l.b16 %v487
          %v527 = vunpack.c.l.b16 %v488
          %v528 = vunpack.c.l.b16 %v489
          %v529 = vunpack.c.l.b16 %v490
          %v530 = vunpack.c.l.b16 %v491
          %v531 = vunpack.c.l.b16 %v492
          %v532 = vunpack.c.l.b16 %v493
          %v533 = vunpack.c.l.b16 %v494
          %v534 = vunpack.c.l.b16 %v495
          %v535 = vunpack.c.l.b16 %v496
          %v536 = vunpack.c.l.b16 %v497
          %v537 = vunpack.c.l.b16 %v498
          %v538 = vunpack.c.l.b16 %v499
          %v539 = vpack.c.b16 %v524, %v523
          %v540 = vpack.c.b16 %v526, %v525
          %v541 = vpack.c.b16 %v528, %v527
          %v542 = vpack.c.b16 %v530, %v529
          %v543 = vpack.c.b16 %v532, %v531
          %v544 = vpack.c.b16 %v534, %v533
          %v545 = vpack.c.b16 %v536, %v535
          %v546 = vpack.c.b16 %v538, %v537
          %555 = vmatprep.subr.bf16.mxu0 0
          %556 = vmatpush1.bf16.msra.mxu0 %v546
          %557 = vmatprep.subr.bf16.mxu0 0
          %558 = vmatpush1.bf16.msra.mxu0 %v545
          %559 = vmatprep.subr.bf16.mxu0 0
          %560 = vmatpush1.bf16.msra.mxu0 %v544
          %561 = vmatprep.subr.bf16.mxu0 0
          %562 = vmatpush1.bf16.msra.mxu0 %v543
          %563 = vmatprep.subr.bf16.mxu0 0
          %564 = vmatpush1.bf16.msra.mxu0 %v542
          %565 = vmatprep.subr.bf16.mxu0 0
          %566 = vmatpush1.bf16.msra.mxu0 %v541
          %567 = vmatprep.subr.bf16.mxu0 0
          %568 = vmatpush1.bf16.msra.mxu0 %v540
          %569 = vmatprep.subr.bf16.mxu0 0
          %570 = vmatpush1.bf16.msra.mxu0 %v539
          %571 = vmatprep.subr.bf16.mxu0 0
          %572 = vmatpush2.bf16.msra.mxu0 0
          %573 = vmatprep.subr.bf16.mxu0 0
          %574 = vmatpush2.bf16.msra.mxu0 0
          %575 = vmatprep.subr.bf16.mxu0 0
          %576 = vmatpush2.bf16.msra.mxu0 0
          %577 = vmatprep.subr.bf16.mxu0 0
          %578 = vmatpush2.bf16.msra.mxu0 0
          %579 = vmatprep.subr.bf16.mxu0 0
          %580 = vmatpush2.bf16.msra.mxu0 0
          %581 = vmatprep.subr.bf16.mxu0 0
          %582 = vmatpush2.bf16.msra.mxu0 0
          %583 = vmatprep.subr.bf16.mxu0 0
          %584 = vmatpush2.bf16.msra.mxu0 0
          %585 = vmatprep.subr.bf16.mxu0 0
          %586 = vmatpush2.bf16.msra.mxu0 0
          %587 = vmatprep.mubr.bf16.mxu0 0
          %588 = vmatmul.mubr.bf16.gmra.mxu0 %v480
          %v589 = vpop.f32.mrf.mxu0
          %v590 = vadd.f32 %v505, %v589
          %v591 = vpop.f32.mrf.mxu0
          %v592 = vpop.f32.mrf.mxu0
          %v593 = vadd.f32 %v505, %v592
          %v594 = vpop.f32.mrf.mxu0
          %595 = vmatprep.mubr.bf16.mxu0 0
          %596 = vmatmul.mubr.bf16.gmra.mxu0 %v481
          %v597 = vpop.f32.mrf.mxu0
          %v598 = vadd.f32 %v505, %v597
          %v599 = vpop.f32.mrf.mxu0
          %v600 = vpop.f32.mrf.mxu0
          %v601 = vadd.f32 %v505, %v600
          %v602 = vpop.f32.mrf.mxu0
          %603 = vmatprep.mubr.bf16.mxu0 0
          %604 = vmatmul.mubr.bf16.gmra.mxu0 %v482
          %v605 = vpop.f32.mrf.mxu0
          %v606 = vadd.f32 %v505, %v605
          %v607 = vpop.f32.mrf.mxu0
          %v608 = vpop.f32.mrf.mxu0
          %v609 = vadd.f32 %v505, %v608
          %v610 = vpop.f32.mrf.mxu0
          %611 = vmatprep.mubr.bf16.mxu0 0
          %612 = vmatmul.mubr.bf16.gmra.mxu0 %v483
          %v613 = vpop.f32.mrf.mxu0
          %v614 = vadd.f32 %v505, %v613
          %v615 = vpop.f32.mrf.mxu0
          %v616 = vpop.f32.mrf.mxu0
          %v617 = vadd.f32 %v505, %v616
          %v618 = vpop.f32.mrf.mxu0
          %619 = vdwg.mxu0
          %620 = vst [vmem:[%s267] sm:$0xff] %v590
          %621 = vst [vmem:[%s267 + $0x8] sm:$0xff] %v593
          %622 = vst [vmem:[%s267 + $0x10] sm:$0xff] %v598
          %623 = vst [vmem:[%s267 + $0x18] sm:$0xff] %v601
          %624 = vst [vmem:[%s267 + $0x20] sm:$0xff] %v606
          %625 = vst [vmem:[%s267 + $0x28] sm:$0xff] %v609
          %626 = vst [vmem:[%s267 + $0x30] sm:$0xff] %v614
          %627 = vst [vmem:[%s267 + $0x38] sm:$0xff] %v617
        $region56: #{tpu_custom_call.1} parent=35 // pred_fallthru
          _
        %s628 = sand.u32 %s138, 1
        %s629 = scalar_lea.sflag [#allocation5], %s628
        %s630 = sand.u32 %s138, 1
        %s631 = smul.addr %s630, 64
        %s632 = scalar_lea.vmem [#allocation9], %s631
        // Predicated region
        $region57: #{tpu_custom_call.1} parent=35 // pred_check
          %p633 = pneg %p148
        $region58: #{tpu_custom_call.1} parent=35 // pred_check_branch
          %635 = sbr.rel (%p633) target = $region60
        $region59: #{tpu_custom_call.1} parent=35 // pred_region
          %s636 = smul.u32 8, %s26
          %s638 = ssub.s32 1024, 1024
          %639 = vsyncadd %s629, %s638
          %s640 = smul.addr %s636, 128
          %s641 = scalar_lea.hbm %s4, %s640
          %s642 = sshll.u32 %s632, 4
          %s643 = int_to_ptr.vmem [resolvable:$true] %s642
          %648 = dma.vmem_to_hbm [thread:$0]  %s643, 1024, %s641, %s629, 128, 128, 8
        $region60: #{tpu_custom_call.1} parent=35 // pred_fallthru
          _
      $region36: #{tpu_custom_call.1} parent=5 // pred_fallthru
        _
      %p649 = scmp.le.s32.totalorder 2, %s17
      // Predicated region
      $region61: #{tpu_custom_call.1} parent=5 // pred_check
        %p650 = pneg %p649
      $region62: #{tpu_custom_call.1} parent=5 // pred_check_branch
        %652 = sbr.rel (%p650) target = $region64
      $region63: #{tpu_custom_call.1} parent=5 // pred_region
        %s653 = ssub.s32 %s17, 2
        // Predicated region
        $region65: #{tpu_custom_call.1} parent=63 // pred_check
          %p654 = pneg %p154
        $region66: #{tpu_custom_call.1} parent=63 // pred_check_branch
          %656 = sbr.rel (%p654) target = $region68
        $region67: #{tpu_custom_call.1} parent=63 // pred_region
          %s657 = sand.u32 %s139, 1
          %s658 = scalar_lea.sflag [#allocation5], %s657
          %s659 = sand.u32 %s139, 1
          %s660 = smul.addr %s659, 64
          %s661 = scalar_lea.vmem [#allocation9], %s660
          %662 = dma.done %s658, 1024
        $region68: #{tpu_custom_call.1} parent=63 // pred_fallthru
          _
      $region64: #{tpu_custom_call.1} parent=5 // pred_fallthru
        _
    $region6: #{tpu_custom_call.1} parent=1 // loop_footer
      %s21 = sadd.s32 1, %s17
    $region7: #{tpu_custom_call.1} parent=1 // loop_footer_branch
      %16 = sbr.rel target = $region3
    $region8: #{tpu_custom_call.1} parent=1 // loop_exit
      _
    %663 = vsyncpa [#allocation4], 1
    %s664 = scalar_lea.sflag [#allocation4], 1
    %665 = vsyncpa %s664, 1
    %666 = vsyncpa [#allocation7], 1
    %667 = vsyncpa [#allocation5], 1
    %s668 = scalar_lea.sflag [#allocation5], 1
    %669 = vsyncpa %s668, 1

</llo_original>
